<compile_context>
chip_gen: v6e
topology: v6e:2x2x1
jax: 0.10.0
libtpu: 0.0.40
codegen_flags: <defaults>
</compile_context>

<pallas_src>
import numpy as np
import jax
import jax.numpy as jnp
from jax.experimental import pallas as pl
from jax.experimental.pallas import tpu as pltpu


def _bilinear_interp_matrix(in_size: int, scale: int) -> np.ndarray:
    """1-D interpolation matrix matching PyTorch nn.Upsample(mode='bilinear',
    align_corners=False): out = A @ in along one spatial axis."""
    out_size = in_size * scale
    A = np.zeros((out_size, in_size), dtype=np.float32)
    for dst in range(out_size):
        src = (dst + 0.5) / scale - 0.5
        src = max(src, 0.0)
        i0 = min(int(np.floor(src)), in_size - 1)
        lam = src - i0
        i1 = min(i0 + 1, in_size - 1)
        A[dst, i0] += 1.0 - lam
        A[dst, i1] += lam
    return A


# ------------------------- stage 1: 1x1 conv + bias -------------------------
def conv1x1_kernel(x_ref, w_ref, b_ref, o_ref):
    # x_ref: (1, C, S)   one image: channels x flattened spatial (lane dim = S)
    # w_ref: (TD, C)     tile of the 1x1 conv weight
    # b_ref: (TD, 1)     conv bias tile (fused here; exact since bilinear rows sum to 1)
    # o_ref: (1, TD, S)  lane-dense output block
    acc = jnp.dot(w_ref[...], x_ref[0], preferred_element_type=jnp.float32)
    o_ref[0] = (acc + b_ref[...]).astype(o_ref.dtype)   # f32 epilogue, then cast


# ------------------- stage 2: separable bilinear upsample -------------------
def upsample_kernel(y_ref, ah_ref, awt_ref, o_ref):
    # y_ref:   (G, Hi, Wi)  block of G channel planes of the conv output
    # ah_ref:  (Ho, Hi)     H-direction interpolation matrix (shared, kept 2-D)
    # awt_ref: (Wi, Wo)     W-direction interpolation matrix, transposed
    # o_ref:   (G, Ho, Wo)
    g, _, wi = y_ref.shape
    ho = ah_ref.shape[0]
    wo = awt_ref.shape[1]
    ah = ah_ref[...]

    # H-direction: batched per-plane MXU dots with the shared 2-D A_h.
    # (No broadcast_in_dim replication of A_h, no 3-D relayout/transposes.)
    t = jnp.stack(
        [jnp.dot(ah, y_ref[i], preferred_element_type=jnp.float32)
         for i in range(g)],
        axis=0)                                            # (G, Ho, Wi), f32

    # W-direction: ONE flattened 2-D matmul with M = G*Ho — A_w^T is pushed to
    # the MXU once per grid step and the result is one wide (G*Ho, Wo) slab.
    t = t.reshape(g * ho, wi).astype(awt_ref.dtype)        # free (Ho % 8 == 0)
    z = jnp.dot(t, awt_ref[...], preferred_element_type=jnp.float32)  # (G*Ho, Wo)
    o_ref[...] = z.reshape(g, ho, wo).astype(o_ref.dtype)


# ------------------------------ tiling helpers ------------------------------
def _pick_embed_tile(D, N, target_steps=8):
    """Divisor of D (multiple of 8, or D itself) so N*(D//TD) >= target_steps
    grid steps when possible; otherwise the smallest legal tile."""
    want_tiles = max(1, -(-target_steps // max(N, 1)))          # ceil
    cands = sorted({d for d in range(8, D + 1, 8) if D % d == 0} | {D})
    ok = [d for d in cands if D // d >= want_tiles]
    return max(ok) if ok else min(cands)


def _pick_plane_block(rows, bytes_per_plane, max_block_bytes=4 << 20,
                      target_steps=8):
    """Divisor of rows: largest block still leaving >= target_steps grid steps
    (when rows allows) and fitting the per-step VMEM budget (v7x-safe)."""
    divs = [d for d in range(1, rows + 1) if rows % d == 0]
    fit = [d for d in divs if d * bytes_per_plane <= max_block_bytes] or [1]
    steps_goal = min(target_steps, rows)
    ok = [d for d in fit if rows // d >= steps_goal]
    return max(ok) if ok else min(fit)


def _vmem_limit(need_bytes):
    # Explicit scoped-VMEM budget: double-buffered blocks + headroom, kept well
    # under v7x's 64 MiB physical VMEM (v5e/v6e have 128 MiB).
    return int(min(56 << 20, max(16 << 20, 2 * need_bytes)))


# --------------------------------- wrapper ----------------------------------
def patch_embed_forward(x_nchw, conv_w, conv_b, patch_size=2, compute_dtype=None):
    """Pallas PatchEmbed forward (upsampling='bilinear').

    x_nchw: (N, C, H, W).  Returns (y_nchw, H_out, W_out).
    compute_dtype: optional reduced precision (e.g. jnp.bfloat16) for MXU
    operands and the stage-1 intermediate; accumulation, bias epilogue and the
    final output stay f32.
    """
    N, C, Hi, Wi = x_nchw.shape
    D = conv_w.shape[0]
    Ho, Wo = Hi * patch_size, Wi * patch_size
    S = Hi * Wi
    out_dtype = x_nchw.dtype
    cdt = out_dtype if compute_dtype is None else compute_dtype
    c_item = jnp.dtype(cdt).itemsize
    o_item = jnp.dtype(out_dtype).itemsize

    # Separable 1-D interpolation matrices (a few KiB) — no dense kron.
    a_h = jnp.asarray(_bilinear_interp_matrix(Hi, patch_size)).astype(cdt)   # (Ho, Hi)
    a_wT = jnp.asarray(np.ascontiguousarray(
        _bilinear_interp_matrix(Wi, patch_size).T)).astype(cdt)              # (Wi, Wo)

    x_flat = x_nchw.reshape(N, C, S).astype(cdt)     # free reshape, stays NCHW
    w2d = conv_w.reshape(D, C).astype(cdt)
    b2d = conv_b.reshape(D, 1).astype(jnp.float32)   # bias added in f32 epilogue

    # ---- stage 1: 1x1 conv (+ bias) at INPUT resolution -----------------------
    # 4x fewer conv FLOPs than conv-after-upsample (exact: conv is linear, every
    # bilinear row sums to 1).  Tiled over (image, embed-dim tile) so even small
    # N gets enough grid steps for the mem-bound stage's DMA pipelining.
    td = _pick_embed_tile(D, N)
    s1_need = 2 * ((C * S + td * S + td * C) * c_item + td * 4) + (1 << 20)
    y = pl.pallas_call(
        conv1x1_kernel,
        out_shape=jax.ShapeDtypeStruct((N, D, S), cdt),
        grid=(N, D // td),
        in_specs=[
            pl.BlockSpec((1, C, S), lambda n, d: (n, 0, 0)),
            pl.BlockSpec((td, C), lambda n, d: (d, 0)),
            pl.BlockSpec((td, 1), lambda n, d: (d, 0)),
        ],
        out_specs=pl.BlockSpec((1, td, S), lambda n, d: (n, d, 0)),
        compiler_params=pltpu.CompilerParams(
            dimension_semantics=("parallel", "parallel"),
            vmem_limit_bytes=_vmem_limit(s1_need)),
    )(x_flat, w2d, b2d)

    # ---- stage 2: separable bilinear upsample over blocks of channel planes ---
    rows = N * D
    plane_bytes = Hi * Wi * c_item + Ho * Wo * o_item
    pb = _pick_plane_block(rows, plane_bytes)
    y_rows = y.reshape(rows, Hi, Wi)                  # free reshape (contiguous)
    # budget: double-buffered in/out blocks + f32 H-upsampled temp + matrices.
    s2_need = (2 * pb * plane_bytes + pb * Ho * Wi * 4
               + (Ho * Hi + Wi * Wo) * c_item + (1 << 20))
    # NOTE: if profiling shows exposed DMA here, add
    # pipeline_mode=pl.Buffered(3) to the y_rows BlockSpec and sweep 2-4.
    z = pl.pallas_call(
        upsample_kernel,
        out_shape=jax.ShapeDtypeStruct((rows, Ho, Wo), out_dtype),
        grid=(rows // pb,),
        in_specs=[
            pl.BlockSpec((pb, Hi, Wi), lambda i: (i, 0, 0)),
            pl.BlockSpec((Ho, Hi), lambda i: (0, 0)),
            pl.BlockSpec((Wi, Wo), lambda i: (0, 0)),
        ],
        out_specs=pl.BlockSpec((pb, Ho, Wo), lambda i: (i, 0, 0)),
        compiler_params=pltpu.CompilerParams(
            dimension_semantics=("parallel",),
            vmem_limit_bytes=_vmem_limit(s2_need)),
    )(y_rows, a_h, a_wT)

    out = z.reshape(N, D, Ho, Wo)                     # free reshape back to NCHW
    return out, Ho, Wo


def patch_embed_reference(x_nchw, conv_w, conv_b, patch_size=2):
    """Pure-JAX reference with the original PyTorch order: upsample, then conv."""
    N, C, Hi, Wi = x_nchw.shape
    D = conv_w.shape[0]
    a_h = jnp.asarray(_bilinear_interp_matrix(Hi, patch_size))
    a_w = jnp.asarray(_bilinear_interp_matrix(Wi, patch_size))
    up = jnp.einsum('oh,nchw->ncow', a_h, x_nchw)
    up = jnp.einsum('pw,ncow->ncop', a_w, up)
    w2d = conv_w.reshape(D, C)
    y = jnp.einsum('dc,ncop->ndop', w2d, up) + conv_b[None, :, None, None]
    return y


if __name__ == "__main__":
    # Small shapes consistent with the module: PatchEmbed(in_chans=32, embed_dim=32, patch_size=2)
    N, C, Hi, Wi = 2, 32, 16, 16
    D = 32
    patch_size = 2

    key = jax.random.PRNGKey(0)
    k_x, k_w, k_b = jax.random.split(key, 3)
    x = jax.random.normal(k_x, (N, C, Hi, Wi), dtype=jnp.float32)

    # Deterministic Conv2d(kernel_size=1) parameter init (Kaiming-uniform-like bound)
    bound = 1.0 / np.sqrt(C)
    conv_w = jax.random.uniform(k_w, (D, C, 1, 1), minval=-bound, maxval=bound,
                                dtype=jnp.float32)
    conv_b = jax.random.uniform(k_b, (D,), minval=-bound, maxval=bound,
                                dtype=jnp.float32)

    ref = patch_embed_reference(x, conv_w, conv_b, patch_size)

    # ---- exact (f32) path ----
    out, H, W = patch_embed_forward(x, conv_w, conv_b, patch_size)
    out = jax.block_until_ready(out)
    assert out.shape == (N, D, Hi * patch_size, Wi * patch_size)
    assert (H, W) == (Hi * patch_size, Wi * patch_size)
    # conv-before-upsample + bias-before-upsample reassociate f32 sums -> a few ulp slack.
    np.testing.assert_allclose(np.asarray(out), np.asarray(ref), rtol=1e-4, atol=1e-5)

    # ---- bf16 MXU-operand / bf16-intermediate path (v6e/v7x fast path) ----
    out_bf, _, _ = patch_embed_forward(x, conv_w, conv_b, patch_size,
                                       compute_dtype=jnp.bfloat16)
    out_bf = jax.block_until_ready(out_bf)
    np.testing.assert_allclose(np.asarray(out_bf), np.asarray(ref),
                               rtol=5e-2, atol=5e-2)

    print("KERNEL_OK")
</pallas_src>

<mosaic_0001>
module attributes {stable_mosaic.version = 11 : i64} {
  func.func @conv1x1_kernel(%arg0: i32, %arg1: i32, %arg2: memref<1x32x256xf32, #tpu.memory_space<vmem>>, %arg3: memref<8x32xf32, #tpu.memory_space<vmem>>, %arg4: memref<8x1xf32, #tpu.memory_space<vmem>>, %arg5: memref<1x8x256xf32, #tpu.memory_space<vmem>>) attributes {dimension_semantics = [#tpu.dimension_semantics<parallel>, #tpu.dimension_semantics<parallel>], iteration_bounds = array<i64: 2, 4>, scalar_prefetch = 0 : i64, scratch_operands = 0 : i64, tpu.core_type = #tpu.core_type<tc>, window_params = [{transform_indices = @transform_0, window_bounds = array<i64: 1, 32, 256>}, {transform_indices = @transform_1, window_bounds = array<i64: 8, 32>}, {transform_indices = @transform_2, window_bounds = array<i64: 8, 1>}, {transform_indices = @transform_3, window_bounds = array<i64: 1, 8, 256>}]} {
    %c0 = arith.constant 0 : index
    %c0_0 = arith.constant 0 : index
    %0 = vector.load %arg3[%c0, %c0_0] : memref<8x32xf32, #tpu.memory_space<vmem>>, vector<8x32xf32>
    %c0_1 = arith.constant 0 : index
    %c0_2 = arith.constant 0 : index
    %c0_3 = arith.constant 0 : index
    %1 = vector.load %arg2[%c0_1, %c0_2, %c0_3] : memref<1x32x256xf32, #tpu.memory_space<vmem>>, vector<1x32x256xf32>
    %2 = vector.shape_cast %1 : vector<1x32x256xf32> to vector<32x256xf32>
    %cst = arith.constant dense<0.000000e+00> : vector<8x256xf32>
    %3 = tpu.matmul %0, %2, %cst {dimension_numbers = #tpu.dot_dimension_numbers<[1], [0], [0], [1], [0, 0, 1, 1], [], []>} : vector<8x32xf32>, vector<32x256xf32>, vector<8x256xf32> -> vector<8x256xf32>
    %c0_4 = arith.constant 0 : index
    %c0_5 = arith.constant 0 : index
    %4 = vector.load %arg4[%c0_4, %c0_5] : memref<8x1xf32, #tpu.memory_space<vmem>>, vector<8x1xf32>
    %5 = vector.broadcast %4 : vector<8x1xf32> to vector<8x256xf32>
    %6 = arith.addf %3, %5 : vector<8x256xf32>
    %c0_6 = arith.constant 0 : index
    %c0_7 = arith.constant 0 : index
    %c0_8 = arith.constant 0 : index
    %7 = vector.load %arg5[%c0_6, %c0_7, %c0_8] : memref<1x8x256xf32, #tpu.memory_space<vmem>>, vector<1x8x256xf32>
    %8 = vector.shape_cast %7 : vector<1x8x256xf32> to vector<8x256xf32>
    %9 = vector.shape_cast %6 : vector<8x256xf32> to vector<1x8x256xf32>
    tpu.vector_store %arg5[%c0_6, %c0_7, %c0_8], %9 {strides = array<i32>} : memref<1x8x256xf32, #tpu.memory_space<vmem>>, vector<1x8x256xf32>,
    return
  }
  func.func @transform_0(%arg0: i32, %arg1: i32) -> (i32, i32, i32) {
    %c0_i32 = arith.constant 0 : i32
    %c0_i32_0 = arith.constant 0 : i32
    %c0_i32_1 = arith.constant 0 : i32
    return %arg0, %c0_i32, %c0_i32_0 : i32, i32, i32
  }
  func.func @transform_1(%arg0: i32, %arg1: i32) -> (i32, i32) {
    %c0_i32 = arith.constant 0 : i32
    %c0_i32_0 = arith.constant 0 : i32
    return %arg1, %c0_i32 : i32, i32
  }
  func.func @transform_2(%arg0: i32, %arg1: i32) -> (i32, i32) {
    %c0_i32 = arith.constant 0 : i32
    %c0_i32_0 = arith.constant 0 : i32
    return %arg1, %c0_i32 : i32, i32
  }
  func.func @transform_3(%arg0: i32, %arg1: i32) -> (i32, i32, i32) {
    %c0_i32 = arith.constant 0 : i32
    %c0_i32_0 = arith.constant 0 : i32
    return %arg0, %arg1, %c0_i32 : i32, i32, i32
  }
}

</mosaic_0001>

<llo_original>
// kernel: tpu_custom_call.1
$region0: #{tpu_custom_call.1}
  #allocation0 [shape = 'u32[]', space=smem, size = 0x4, offset = 0x4, fixed_abs, tag = 'smem constant byte address 0x4 - core index']
  #allocation1 [shape = 'u32[144,128]{1,0:T(1,128)}', space=vmem, size = 0x12000, scoped, tag = 'internal scratch']
  %s0 = inlined_call_operand.hbm [shape: f32[2,32,256], index: 0, kind: input, shape index: {}]
  %s1 = inlined_call_operand.vmem [shape: f32[32,32], index: 1, kind: input, shape index: {}]
  %s2 = inlined_call_operand.vmem [shape: f32[32,1], index: 2, kind: input, shape index: {}]
  %s3 = inlined_call_operand.hbm [shape: f32[2,32,256], index: 3, kind: output, shape index: {}]
  %s4 = sld [smem:[#allocation0]]
  $region49: #{tpu_custom_call.1} parent=0
    _
  %s6 = ssub.s32 1, %s4
  %s7 = scalar_select 0, %s6, %s4
  $region1: #{tpu_custom_call.1} parent=0
    #allocation2 [shape = 'u8[65536]{0}', space=vmem, size = 0x10000, scoped, tag = 'input window, operand 0']
    #allocation3 [shape = 's32[2]{0}', space=sflag, size = 0x8, scoped, tag = 'scoped memory for tpu_custom_call.1']
    #allocation4 [shape = 's32[2]{0}', space=sflag, size = 0x8, scoped, tag = 'scoped memory for tpu_custom_call.1']
    #allocation5 [shape = 'u8[16384]{0}', space=vmem, size = 0x4000, scoped, tag = 'output window, operand 0']
    %8 = vsyncpa [#allocation3], 0
    %s9 = scalar_lea.sflag [#allocation3], 1
    %10 = vsyncpa %s9, 0
    %11 = vsyncpa [#allocation4], 0
    %s12 = scalar_lea.sflag [#allocation4], 1
    %13 = vsyncpa %s12, 0
    loop: start=0, step=1, limit=10
    $region2: #{tpu_custom_call.1} parent=1 // loop_pre_header
      _
    $region3: #{tpu_custom_call.1} parent=1 // loop_header
      %s15 = sphi 0, %s19
      %p16 = scmp.ge.s32.totalorder %s15, 10
      %s22 = sphi 0, %s34
      %s23 = sphi 0, %s30
      %s24 = sphi 0, %s22
      %s25 = sphi 0, %s23
      %s26 = sphi 0, %s24
      %s27 = sphi 0, %s25
      %s37 = sphi 0, %s39
      %s40 = sphi 0, %s37
      %s41 = sphi 0, %s40
      %s57 = sphi 0, %s41
      %s63 = sphi 0, %s65
      %s66 = sphi 0, %s63
      %s67 = sphi 0, %s66
      %s83 = sphi 0, %s67
      %s89 = sphi 0, %s91
      %s92 = sphi 0, %s89
      %s93 = sphi 0, %s92
      %s109 = sphi 0, %s93
      %s117 = sphi 0, %s119
      %s120 = sphi 0, %s117
      %s121 = sphi 0, %s120
      %s137 = sphi 0, %s121
    $region4: #{tpu_custom_call.1} parent=1 // loop_header_branch
      %18 = sbr.rel (%p16) target = $region8
    $region5: #{tpu_custom_call.1} parent=1 // loop_body
      %s20 = ssub.s32 %s15, 1
      %s21 = ssub.s32 %s15, 2
      %s28 = sadd.s32 1, %s23
      %p29 = scmp.ge.s32.totalorder %s28, 4
      %s30 = scalar_select %p29, 0, %s28
      %s31 = sadd.s32 1, %s22
      %s32 = scalar_select %p29, %s31, %s22
      %p33 = scmp.ge.s32.totalorder %s32, 2
      %s34 = scalar_select %p33, 0, %s32
      %s35 = ssub.s32 %s22, %s34
      %p36 = scmp.eq.s32.totalorder %s35, 0
      %s38 = sadd.s32 %s37, 1
      %s39 = scalar_select %p36, %s37, %s38
      %p42 = pneg %p36
      %p43 = scmp.eq.s32.totalorder %s15, 7
      %p44 = por %p42, %p43
      %p45 = scmp.ne.s32.totalorder %s37, %s40
      %p46 = scmp.eq.s32.totalorder %s15, 0
      %p47 = por %p45, %p46
      %p48 = scmp.ne.s32.totalorder %s37, %s40
      %p49 = scmp.eq.s32.totalorder %s20, 7
      %p50 = por %p48, %p49
      %p51 = scmp.ne.s32.totalorder %s40, %s41
      %p52 = scmp.eq.s32.totalorder %s20, 0
      %p53 = por %p51, %p52
      %p54 = scmp.ne.s32.totalorder %s40, %s41
      %p55 = scmp.eq.s32.totalorder %s21, 7
      %p56 = por %p54, %p55
      %p58 = scmp.ne.s32.totalorder %s41, %s57
      %p59 = scmp.eq.s32.totalorder %s21, 0
      %p60 = por %p58, %p59
      %s61 = ssub.s32 %s23, %s30
      %p62 = scmp.eq.s32.totalorder %s61, 0
      %s64 = sadd.s32 %s63, 1
      %s65 = scalar_select %p62, %s63, %s64
      %p68 = pneg %p62
      %p69 = scmp.eq.s32.totalorder %s15, 7
      %p70 = por %p68, %p69
      %p71 = scmp.ne.s32.totalorder %s63, %s66
      %p72 = scmp.eq.s32.totalorder %s15, 0
      %p73 = por %p71, %p72
      %p74 = scmp.ne.s32.totalorder %s63, %s66
      %p75 = scmp.eq.s32.totalorder %s20, 7
      %p76 = por %p74, %p75
      %p77 = scmp.ne.s32.totalorder %s66, %s67
      %p78 = scmp.eq.s32.totalorder %s20, 0
      %p79 = por %p77, %p78
      %p80 = scmp.ne.s32.totalorder %s66, %s67
      %p81 = scmp.eq.s32.totalorder %s21, 7
      %p82 = por %p80, %p81
      %p84 = scmp.ne.s32.totalorder %s67, %s83
      %p85 = scmp.eq.s32.totalorder %s21, 0
      %p86 = por %p84, %p85
      %s87 = ssub.s32 %s23, %s30
      %p88 = scmp.eq.s32.totalorder %s87, 0
      %s90 = sadd.s32 %s89, 1
      %s91 = scalar_select %p88, %s89, %s90
      %p94 = pneg %p88
      %p95 = scmp.eq.s32.totalorder %s15, 7
      %p96 = por %p94, %p95
      %p97 = scmp.ne.s32.totalorder %s89, %s92
      %p98 = scmp.eq.s32.totalorder %s15, 0
      %p99 = por %p97, %p98
      %p100 = scmp.ne.s32.totalorder %s89, %s92
      %p101 = scmp.eq.s32.totalorder %s20, 7
      %p102 = por %p100, %p101
      %p103 = scmp.ne.s32.totalorder %s92, %s93
      %p104 = scmp.eq.s32.totalorder %s20, 0
      %p105 = por %p103, %p104
      %p106 = scmp.ne.s32.totalorder %s92, %s93
      %p107 = scmp.eq.s32.totalorder %s21, 7
      %p108 = por %p106, %p107
      %p110 = scmp.ne.s32.totalorder %s93, %s109
      %p111 = scmp.eq.s32.totalorder %s21, 0
      %p112 = por %p110, %p111
      %s113 = ssub.s32 %s22, %s34
      %s114 = ssub.s32 %s23, %s30
      %s115 = sor.u32 %s113, %s114
      %p116 = scmp.eq.s32.totalorder %s115, 0
      %s118 = sadd.s32 %s117, 1
      %s119 = scalar_select %p116, %s117, %s118
      %p122 = pneg %p116
      %p123 = scmp.eq.s32.totalorder %s15, 7
      %p124 = por %p122, %p123
      %p125 = scmp.ne.s32.totalorder %s117, %s120
      %p126 = scmp.eq.s32.totalorder %s15, 0
      %p127 = por %p125, %p126
      %p128 = scmp.ne.s32.totalorder %s117, %s120
      %p129 = scmp.eq.s32.totalorder %s20, 7
      %p130 = por %p128, %p129
      %p131 = scmp.ne.s32.totalorder %s120, %s121
      %p132 = scmp.eq.s32.totalorder %s20, 0
      %p133 = por %p131, %p132
      %p134 = scmp.ne.s32.totalorder %s120, %s121
      %p135 = scmp.eq.s32.totalorder %s21, 7
      %p136 = por %p134, %p135
      %p138 = scmp.ne.s32.totalorder %s121, %s137
      %p139 = scmp.eq.s32.totalorder %s21, 0
      %p140 = por %p138, %p139
      %p141 = scmp.le.s32.totalorder 1, %s15
      %p142 = scmp.lt.s32.totalorder %s15, 9
      %p143 = pnand %p141, %p142
      %p144 = pneg %p143
      // Predicated region
      $region9: #{tpu_custom_call.1} parent=5 // pred_check
        _
      $region10: #{tpu_custom_call.1} parent=5 // pred_check_branch
        %146 = sbr.rel (%p143) target = $region12
      $region11: #{tpu_custom_call.1} parent=5 // pred_region
        %s147 = ssub.s32 %s15, 1
      $region12: #{tpu_custom_call.1} parent=5 // pred_fallthru
        _
      %p148 = scmp.lt.s32.totalorder %s15, 8
      // Predicated region
      $region13: #{tpu_custom_call.1} parent=5 // pred_check
        %p149 = pneg %p148
      $region14: #{tpu_custom_call.1} parent=5 // pred_check_branch
        %151 = sbr.rel (%p149) target = $region16
      $region15: #{tpu_custom_call.1} parent=5 // pred_region
        // Predicated region
        $region17: #{tpu_custom_call.1} parent=15 // pred_check
          %p152 = pneg %p47
        $region18: #{tpu_custom_call.1} parent=15 // pred_check_branch
          %154 = sbr.rel (%p152) target = $region20
        $region19: #{tpu_custom_call.1} parent=15 // pred_region
          %s155 = sand.u32 %s37, 1
          %s156 = scalar_lea.sflag [#allocation3], %s155
          %s157 = sand.u32 %s37, 1
          %s158 = smul.addr %s157, 64
          %s159 = scalar_lea.vmem [#allocation2], %s158
          %s161 = ssub.s32 1024, 1024
          %162 = vsyncadd %s156, %s161
          %s163 = smul.addr %s22, 8
          %s164 = smul.addr %s163, 128
          %s165 = scalar_lea.hbm %s0, %s164
          %s166 = sshll.u32 %s159, 4
          %s167 = int_to_ptr.vmem [resolvable:$true] %s166
          %172 = dma.hbm_to_vmem [thread:$0]  %s165, 1024, %s167, %s156, 256, 256, 16
        $region20: #{tpu_custom_call.1} parent=15 // pred_fallthru
          _
        // Predicated region
        $region21: #{tpu_custom_call.1} parent=15 // pred_check
          %p173 = pneg %p73
        $region22: #{tpu_custom_call.1} parent=15 // pred_check_branch
          %175 = sbr.rel (%p173) target = $region24
        $region23: #{tpu_custom_call.1} parent=15 // pred_region
          %p176 = scmp.lt.s32.totalorder %s23, 3
          %s177 = scalar_select %p176, %s23, 3
          %s178 = smul.addr %s177, 8
          %s179 = scalar_lea.vmem %s1, %s178
        $region24: #{tpu_custom_call.1} parent=15 // pred_fallthru
          _
        // Predicated region
        $region25: #{tpu_custom_call.1} parent=15 // pred_check
          %p180 = pneg %p99
        $region26: #{tpu_custom_call.1} parent=15 // pred_check_branch
          %182 = sbr.rel (%p180) target = $region28
        $region27: #{tpu_custom_call.1} parent=15 // pred_region
          %p183 = scmp.lt.s32.totalorder %s23, 3
          %s184 = scalar_select %p183, %s23, 3
          %s185 = smul.addr %s184, 8
          %s186 = scalar_lea.vmem %s2, %s185
        $region28: #{tpu_custom_call.1} parent=15 // pred_fallthru
          _
      $region16: #{tpu_custom_call.1} parent=5 // pred_fallthru
        _
      %p187 = scmp.le.s32.totalorder 1, %s15
      %p188 = scmp.lt.s32.totalorder %s15, 9
      %p189 = pnand %p187, %p188
      %p190 = pneg %p189
      // Predicated region
      $region29: #{tpu_custom_call.1} parent=5 // pred_check
        _
      $region30: #{tpu_custom_call.1} parent=5 // pred_check_branch
        %192 = sbr.rel (%p189) target = $region32
      $region31: #{tpu_custom_call.1} parent=5 // pred_region
        %s193 = ssub.s32 %s15, 1
        %s194 = sand.u32 %s40, 1
        %s195 = scalar_lea.sflag [#allocation3], %s194
        %s196 = sand.u32 %s40, 1
        %s197 = smul.addr %s196, 64
        %s198 = scalar_lea.vmem [#allocation2], %s197
        // Predicated region
        $region33: #{tpu_custom_call.1} parent=31 // pred_check
          %p199 = pneg %p53
        $region34: #{tpu_custom_call.1} parent=31 // pred_check_branch
          %201 = sbr.rel (%p199) target = $region36
        $region35: #{tpu_custom_call.1} parent=31 // pred_region
          %202 = dma.done %s195, 1024
        $region36: #{tpu_custom_call.1} parent=31 // pred_fallthru
          _
        %s203 = sand.u32 %s40, 1
        %s204 = scalar_lea.sflag [#allocation3], %s203
        %s205 = sand.u32 %s40, 1
        %s206 = smul.addr %s205, 64
        %s207 = scalar_lea.vmem [#allocation2], %s206
        %p208 = pneg %p53
        %p209 = pneg %p50
        %p210 = scmp.lt.s32.totalorder %s25, 3
        %s211 = scalar_select %p210, %s25, 3
        %s212 = smul.addr %s211, 8
        %s213 = scalar_lea.vmem %s1, %s212
        %p214 = pneg %p79
        %p215 = pneg %p76
        %p216 = scmp.lt.s32.totalorder %s25, 3
        %s217 = scalar_select %p216, %s25, 3
        %s218 = smul.addr %s217, 8
        %s219 = scalar_lea.vmem %s2, %s218
        %p220 = pneg %p105
        %p221 = pneg %p102
        %p222 = pneg %p133
        %p223 = pneg %p130
        %s224 = sand.u32 %s120, 1
        %s225 = scalar_lea.sflag [#allocation4], %s224
        %s226 = sand.u32 %s120, 1
        %s227 = smul.addr %s226, 16
        %s228 = scalar_lea.vmem [#allocation5], %s227
        %p229 = scmp.lt.s32.totalorder %s25, 3
        %s230 = scalar_select %p229, %s25, 3
        %s231 = smul.addr %s230, 8
        %s232 = scalar_lea.vmem %s1, %s231
        %p233 = scmp.lt.s32.totalorder %s25, 3
        %s234 = scalar_select %p233, %s25, 3
        %s235 = smul.addr %s234, 8
        %s236 = scalar_lea.vmem %s2, %s235
        %v237 = vld [vmem:[%s232] sm:$0xff]
        %v238 = vld [vmem:[%s198] sm:$0xff]
        %v239 = vld [vmem:[%s198 + $0x8] sm:$0xff]
        %v240 = vld [vmem:[%s198 + $0x10] sm:$0xff]
        %v241 = vld [vmem:[%s198 + $0x18] sm:$0xff]
        %v242 = vld [vmem:[%s198 + $0x20] sm:$0xff]
        %v243 = vld [vmem:[%s198 + $0x28] sm:$0xff]
        %v244 = vld [vmem:[%s198 + $0x30] sm:$0xff]
        %v245 = vld [vmem:[%s198 + $0x38] sm:$0xff]
        %v246 = vld [vmem:[%s236] sm:$0xff]
        %248 = vset.pattern.permute.xlu0 0
        %249 = vperm.xlu0 %248, %v246
        %v250 = vpop.permute.xlu0 %249
        %vm252 = vcmask 261120
        %v254 = vsel %vm252, %v237, 0
        %256 = vmatprep.subr.mxu0 0.0
        %257 = vmatpush1.msra.mxu0 0.0
        %258 = vmatprep.subr.mxu0 0.0
        %259 = vmatpush1.msra.mxu0 0.0
        %260 = vmatprep.subr.mxu0 0.0
        %261 = vmatpush1.msra.mxu0 0.0
        %262 = vmatprep.subr.mxu0 0.0
        %263 = vmatpush1.msra.mxu0 0.0
        %264 = vmatprep.subr.mxu0 0.0
        %265 = vmatpush1.msra.mxu0 0.0
        %266 = vmatprep.subr.mxu0 0.0
        %267 = vmatpush1.msra.mxu0 0.0
        %268 = vmatprep.subr.mxu0 0.0
        %269 = vmatpush1.msra.mxu0 0.0
        %270 = vmatprep.subr.mxu0 0.0
        %271 = vmatpush1.msra.mxu0 0.0
        %272 = vmatprep.subr.mxu0 0.0
        %273 = vmatpush1.msra.mxu0 0.0
        %274 = vmatprep.subr.mxu0 0.0
        %275 = vmatpush1.msra.mxu0 0.0
        %276 = vmatprep.subr.mxu0 0.0
        %277 = vmatpush1.msra.mxu0 0.0
        %278 = vmatprep.subr.mxu0 0.0
        %279 = vmatpush1.msra.mxu0 0.0
        %280 = vmatprep.subr.mxu0 %v245
        %281 = vmatpush1.msra.mxu0 %v244
        %282 = vmatprep.subr.mxu0 %v243
        %283 = vmatpush1.msra.mxu0 %v242
        %284 = vmatprep.subr.mxu0 %v241
        %285 = vmatpush1.msra.mxu0 %v240
        %286 = vmatprep.subr.mxu0 %v239
        %287 = vmatpush1.msra.mxu0 %v238
        %288 = vmatprep.subr.mxu0 0.0
        %289 = vmatpush2.msra.mxu0 0.0
        %290 = vmatprep.subr.mxu0 0.0
        %291 = vmatpush2.msra.mxu0 0.0
        %292 = vmatprep.subr.mxu0 0.0
        %293 = vmatpush2.msra.mxu0 0.0
        %294 = vmatprep.subr.mxu0 0.0
        %295 = vmatpush2.msra.mxu0 0.0
        %296 = vmatprep.subr.mxu0 0.0
        %297 = vmatpush2.msra.mxu0 0.0
        %298 = vmatprep.subr.mxu0 0.0
        %299 = vmatpush2.msra.mxu0 0.0
        %300 = vmatprep.subr.mxu0 0.0
        %301 = vmatpush2.msra.mxu0 0.0
        %302 = vmatprep.subr.mxu0 0.0
        %303 = vmatpush2.msra.mxu0 0.0
        %304 = vmatprep.subr.mxu0 0.0
        %305 = vmatpush2.msra.mxu0 0.0
        %306 = vmatprep.subr.mxu0 0.0
        %307 = vmatpush2.msra.mxu0 0.0
        %308 = vmatprep.subr.mxu0 0.0
        %309 = vmatpush2.msra.mxu0 0.0
        %310 = vmatprep.subr.mxu0 0.0
        %311 = vmatpush2.msra.mxu0 0.0
        %312 = vmatprep.subr.mxu0 0.0
        %313 = vmatpush2.msra.mxu0 0.0
        %314 = vmatprep.subr.mxu0 0.0
        %315 = vmatpush2.msra.mxu0 0.0
        %316 = vmatprep.subr.mxu0 0.0
        %317 = vmatpush2.msra.mxu0 0.0
        %318 = vmatprep.subr.mxu0 0.0
        %319 = vmatpush2.msra.mxu0 0.0
        %320 = vmatprep.mubr.f32.mxu0 0.0
        %321 = vmatmul.mubr.f32.gmra.mxu0 %v254
        %v322 = vpop.f32.mrf.mxu0
        %v323 = vadd.f32 %v250, %v322
        %v324 = vpop.f32.mrf.mxu0
        %v325 = vadd.f32 %v250, %v324
        %326 = vdwg.mxu0
        %327 = vst [vmem:[%s228] sm:$0xff] %v323
        %328 = vst [vmem:[%s228 + $0x8] sm:$0xff] %v325
        %s329 = sand.u32 %s120, 1
        %s330 = scalar_lea.sflag [#allocation4], %s329
        %s331 = sand.u32 %s120, 1
        %s332 = smul.addr %s331, 16
        %s333 = scalar_lea.vmem [#allocation5], %s332
        // Predicated region
        $region37: #{tpu_custom_call.1} parent=31 // pred_check
          %p334 = pneg %p130
        $region38: #{tpu_custom_call.1} parent=31 // pred_check_branch
          %336 = sbr.rel (%p334) target = $region40
        $region39: #{tpu_custom_call.1} parent=31 // pred_region
          %s338 = ssub.s32 256, 256
          %339 = vsyncadd %s330, %s338
          %s340 = smul.addr %s25, 2
          %s341 = smul.addr %s24, 8
          %s342 = sadd.s32 %s340, %s341
          %s343 = smul.addr %s342, 128
          %s344 = scalar_lea.hbm %s3, %s343
          %s346 = sshll.u32 %s333, 4
          %s347 = int_to_ptr.vmem [resolvable:$true] %s346
          %349 = dma.vmem_to_hbm [thread:$0]  %s347, 256, %s344, %s330
        $region40: #{tpu_custom_call.1} parent=31 // pred_fallthru
          _
      $region32: #{tpu_custom_call.1} parent=5 // pred_fallthru
        _
      %p350 = scmp.le.s32.totalorder 2, %s15
      // Predicated region
      $region41: #{tpu_custom_call.1} parent=5 // pred_check
        %p351 = pneg %p350
      $region42: #{tpu_custom_call.1} parent=5 // pred_check_branch
        %353 = sbr.rel (%p351) target = $region44
      $region43: #{tpu_custom_call.1} parent=5 // pred_region
        %s354 = ssub.s32 %s15, 2
        // Predicated region
        $region45: #{tpu_custom_call.1} parent=43 // pred_check
          %p355 = pneg %p136
        $region46: #{tpu_custom_call.1} parent=43 // pred_check_branch
          %357 = sbr.rel (%p355) target = $region48
        $region47: #{tpu_custom_call.1} parent=43 // pred_region
          %s358 = sand.u32 %s121, 1
          %s359 = scalar_lea.sflag [#allocation4], %s358
          %s360 = sand.u32 %s121, 1
          %s361 = smul.addr %s360, 16
          %s362 = scalar_lea.vmem [#allocation5], %s361
          %363 = dma.done %s359, 256
        $region48: #{tpu_custom_call.1} parent=43 // pred_fallthru
          _
      $region44: #{tpu_custom_call.1} parent=5 // pred_fallthru
        _
    $region6: #{tpu_custom_call.1} parent=1 // loop_footer
      %s19 = sadd.s32 1, %s15
    $region7: #{tpu_custom_call.1} parent=1 // loop_footer_branch
      %14 = sbr.rel target = $region3
    $region8: #{tpu_custom_call.1} parent=1 // loop_exit
      _
    %364 = vsyncpa [#allocation3], 1
    %s365 = scalar_lea.sflag [#allocation3], 1
    %366 = vsyncpa %s365, 1
    %367 = vsyncpa [#allocation4], 1
    %s368 = scalar_lea.sflag [#allocation4], 1
    %369 = vsyncpa %s368, 1

</llo_original>
